<compile_context>
chip_gen: v7x
topology: tpu7x:2x2x1
jax: 0.10.0
libtpu: 0.0.40
codegen_flags: <defaults>
</compile_context>

<pallas_src>
import functools
import math

import jax
import jax.numpy as jnp
from jax.experimental import pallas as pl
from jax.experimental.pallas import tpu as pltpu

_LANE = 128


def _round_up(x, m):
    return ((x + m - 1) // m) * m


def _rmsnorm_kernel(x_ref, w_ref, o_ref, *, eps, inv_hidden, cast_before_scale):
    # Variance in float32, exactly like the PyTorch reference.
    x_f32 = x_ref[...].astype(jnp.float32)
    ssq = jnp.sum(x_f32 * x_f32, axis=-1, keepdims=True)        # (tm, 1)
    inv_rms = jax.lax.rsqrt(ssq * inv_hidden + eps)              # float32
    y = x_f32 * inv_rms
    if cast_before_scale:
        # torch: cast (x * rsqrt) to the half-precision weight dtype, THEN
        # multiply by the weight (in the weight dtype).
        o_ref[...] = w_ref[...] * y.astype(o_ref.dtype)
    else:
        o_ref[...] = (w_ref[...].astype(jnp.float32) * y).astype(o_ref.dtype)


def _tpu_hw_params():
    """Returns (physical VMEM bytes per TensorCore, chip has 2 TensorCores)."""
    kind = ""
    try:
        kind = jax.devices()[0].device_kind.lower()
    except Exception:
        pass
    is_v7 = ("v7" in kind) or ("7x" in kind) or ("tpu7" in kind)
    two_cores = is_v7 or ("v4" in kind) or ("v5p" in kind)
    vmem = None
    try:
        vmem = int(pltpu.get_tpu_info().vmem_capacity_bytes)
    except Exception:
        vmem = None
    if vmem is None or vmem <= 0:
        vmem = (64 << 20) if is_v7 else (128 << 20)
    return vmem, two_cores


def pix2struct_layer_norm(hidden_states, weight, eps=1e-6, *, max_block_rows=2048):
    """T5-style layer norm over the last axis of `hidden_states`.

    hidden_states: (..., hidden);  weight: (hidden,)
    """
    orig_shape = hidden_states.shape
    hidden = orig_shape[-1]
    rows = math.prod(orig_shape[:-1])

    weight_is_half = weight.dtype in (jnp.float16, jnp.bfloat16)
    if weight_is_half:
        out_dtype = weight.dtype
    else:
        out_dtype = jnp.promote_types(
            jnp.promote_types(hidden_states.dtype, jnp.float32), weight.dtype)

    x2d = hidden_states.reshape(rows, hidden)
    w_row = weight.reshape(1, hidden)

    in_bytes = x2d.dtype.itemsize
    out_bytes = jnp.dtype(out_dtype).itemsize
    w_bytes = weight.dtype.itemsize
    # Sub-32-bit dtypes pack rows along sublanes: 8 (f32) / 16 (bf16) / 32 (i8).
    row_align = 8 * (4 // min(in_bytes, out_bytes, 4))

    # ---- Generation-aware VMEM budget (kernel is HBM-bandwidth bound). ----
    phys_vmem, two_cores = _tpu_hw_params()
    if phys_vmem <= (64 << 20):          # v7x: 64 MiB per TensorCore
        vmem_budget = 24 << 20
        vmem_cap = 40 << 20
    else:                                # v5e / v6e: 128 MiB
        vmem_budget = 48 << 20
        vmem_cap = 96 << 20

    # Per-row VMEM bytes: double-buffered in+out tiles plus the live f32
    # intermediate held across the lane reduction (lanes padded to 128).
    hp_lanes = _round_up(hidden, _LANE)
    per_row_bytes = hp_lanes * (2 * in_bytes + 2 * out_bytes + 4)
    tm_max = max(row_align,
                 (vmem_budget // per_row_bytes) // row_align * row_align)
    tm_max = min(tm_max, max_block_rows)

    # ---- Row-tile selection; no row padding, ragged last block is fine. ----
    if rows <= tm_max and not (two_cores and rows >= 2 * row_align):
        tm = rows                         # single full-extent tile
    elif two_cores:
        # Keep an even number of grid steps so both TensorCores stay busy.
        n_steps = max(2, pl.cdiv(rows, tm_max))
        if n_steps % 2:
            n_steps += 1
        tm = min(tm_max, _round_up(pl.cdiv(rows, n_steps), row_align))
    else:
        tm = tm_max                       # single-TC chips: biggest tile wins
    grid = pl.cdiv(rows, tm)

    # Scoped-VMEM limit: pipeline buffers + live f32 intermediate + weight.
    footprint = (2 * tm * hp_lanes * (in_bytes + out_bytes)
                 + tm * hp_lanes * 4
                 + 2 * hp_lanes * w_bytes)
    vmem_limit = int(max(32 << 20, min(vmem_cap, footprint + (4 << 20))))

    cost = pl.CostEstimate(
        flops=3 * rows * hidden,
        transcendentals=rows,
        bytes_accessed=rows * hidden * (in_bytes + out_bytes) + hidden * w_bytes,
    )

    kernel = functools.partial(
        _rmsnorm_kernel,
        eps=eps,
        inv_hidden=1.0 / float(hidden),
        cast_before_scale=weight_is_half,
    )

    out2d = pl.pallas_call(
        kernel,
        out_shape=jax.ShapeDtypeStruct((rows, hidden), out_dtype),
        grid_spec=pltpu.PrefetchScalarGridSpec(
            num_scalar_prefetch=0,
            grid=(grid,),
            in_specs=[
                pl.BlockSpec((tm, hidden), lambda i: (i, 0)),
                pl.BlockSpec((1, hidden), lambda i: (0, 0)),
            ],
            out_specs=pl.BlockSpec((tm, hidden), lambda i: (i, 0)),
        ),
        compiler_params=pltpu.CompilerParams(
            dimension_semantics=("parallel",),
            vmem_limit_bytes=vmem_limit,
        ),
        cost_estimate=cost,
    )(x2d, w_row)

    return out2d.reshape(orig_shape)


def _reference(hidden_states, weight, eps=1e-6):
    variance = jnp.mean(hidden_states.astype(jnp.float32) ** 2,
                        axis=-1, keepdims=True)
    hs = hidden_states * jax.lax.rsqrt(variance + eps)
    if weight.dtype in (jnp.float16, jnp.bfloat16):
        hs = hs.astype(weight.dtype)
    return weight * hs


if __name__ == "__main__":
    key = jax.random.PRNGKey(0)
    batch, seq, hidden = 2, 8, 32
    eps = 1e-6

    x = jax.random.normal(key, (batch, seq, hidden), dtype=jnp.float32)
    # nn.Parameter(torch.ones(hidden_size))
    weight = jnp.ones((hidden,), dtype=jnp.float32)

    out = jax.block_until_ready(pix2struct_layer_norm(x, weight, eps))
    ref = _reference(x, weight, eps)
    assert out.shape == ref.shape and out.dtype == ref.dtype
    assert jnp.allclose(out, ref, atol=1e-5, rtol=1e-5)

    # Half-precision weight path (torch casts before the weight multiply).
    xb = x.astype(jnp.bfloat16)
    wb = jnp.full((hidden,), 1.5, dtype=jnp.bfloat16)
    outb = jax.block_until_ready(pix2struct_layer_norm(xb, wb, eps))
    refb = _reference(xb, wb, eps)
    assert outb.shape == refb.shape and outb.dtype == refb.dtype
    assert jnp.allclose(outb.astype(jnp.float32), refb.astype(jnp.float32),
                        atol=2e-2, rtol=2e-2)

    print("KERNEL_OK")
</pallas_src>

<mosaic_0001>
module attributes {stable_mosaic.version = 11 : i64} {
  func.func @_rmsnorm_kernel(%arg0: i32, %arg1: memref<16x32xf32, #tpu.memory_space<vmem>>, %arg2: memref<1x32xf32, #tpu.memory_space<vmem>>, %arg3: memref<16x32xf32, #tpu.memory_space<vmem>>) attributes {dimension_semantics = [#tpu.dimension_semantics<parallel>], iteration_bounds = array<i64: 1>, scalar_prefetch = 0 : i64, scratch_operands = 0 : i64, tpu.core_type = #tpu.core_type<tc>, window_params = [{transform_indices = @transform_0, window_bounds = array<i64: 16, 32>}, {pipeline_mode = #tpu.pipeline_mode<synchronous>, transform_indices = @transform_1, window_bounds = array<i64: 1, 32>}, {transform_indices = @transform_2, window_bounds = array<i64: 16, 32>}]} {
    %c0 = arith.constant 0 : index
    %c0_0 = arith.constant 0 : index
    %0 = vector.load %arg1[%c0, %c0_0] : memref<16x32xf32, #tpu.memory_space<vmem>>, vector<16x32xf32>
    %1 = arith.mulf %0, %0 : vector<16x32xf32>
    %cst = arith.constant dense<0.000000e+00> : vector<16xf32>
    %2 = vector.multi_reduction <add>, %1, %cst [1] : vector<16x32xf32> to vector<16xf32>
    %3 = vector.shape_cast %2 : vector<16xf32> to vector<16x1xf32>
    %cst_1 = arith.constant 3.125000e-02 : f32
    %4 = vector.broadcast %cst_1 : f32 to vector<16x1xf32>
    %5 = arith.mulf %3, %4 : vector<16x1xf32>
    %cst_2 = arith.constant 9.99999997E-7 : f32
    %6 = vector.broadcast %cst_2 : f32 to vector<16x1xf32>
    %7 = arith.addf %5, %6 : vector<16x1xf32>
    %8 = math.rsqrt %7 : vector<16x1xf32>
    %9 = vector.broadcast %8 : vector<16x1xf32> to vector<16x32xf32>
    %10 = arith.mulf %0, %9 : vector<16x32xf32>
    %c0_3 = arith.constant 0 : index
    %c0_4 = arith.constant 0 : index
    %11 = vector.load %arg2[%c0_3, %c0_4] : memref<1x32xf32, #tpu.memory_space<vmem>>, vector<1x32xf32>
    %12 = vector.broadcast %11 : vector<1x32xf32> to vector<16x32xf32>
    %13 = arith.mulf %12, %10 : vector<16x32xf32>
    %c0_5 = arith.constant 0 : index
    %c0_6 = arith.constant 0 : index
    %14 = vector.load %arg3[%c0_5, %c0_6] : memref<16x32xf32, #tpu.memory_space<vmem>>, vector<16x32xf32>
    tpu.vector_store %arg3[%c0_5, %c0_6], %13 {strides = array<i32>} : memref<16x32xf32, #tpu.memory_space<vmem>>, vector<16x32xf32>,
    return
  }
  func.func @transform_0(%arg0: i32) -> (i32, i32) {
    %c0_i32 = arith.constant 0 : i32
    %c0_i32_0 = arith.constant 0 : i32
    return %arg0, %c0_i32 : i32, i32
  }
  func.func @transform_1(%arg0: i32) -> (i32, i32) {
    %c0_i32 = arith.constant 0 : i32
    %c0_i32_0 = arith.constant 0 : i32
    %c0_i32_1 = arith.constant 0 : i32
    return %c0_i32, %c0_i32_0 : i32, i32
  }
  func.func @transform_2(%arg0: i32) -> (i32, i32) {
    %c0_i32 = arith.constant 0 : i32
    %c0_i32_0 = arith.constant 0 : i32
    return %arg0, %c0_i32 : i32, i32
  }
}

</mosaic_0001>

<llo_original>
// kernel: tpu_custom_call.1
$region0: #{tpu_custom_call.1}
  #allocation0 [shape = 'u32[]', space=smem, size = 0x4, offset = 0x4, fixed_abs, tag = 'smem constant byte address 0x4 - core index']
  #allocation1 [shape = 'u32[144,128]{1,0:T(1,128)}', space=vmem, size = 0x12000, scoped, tag = 'internal scratch']
  %s0 = inlined_call_operand.hbm [shape: f32[16,32], index: 0, kind: input, shape index: {}]
  %s1 = inlined_call_operand.vmem [shape: f32[1,32], index: 1, kind: input, shape index: {}]
  %s2 = inlined_call_operand.hbm [shape: f32[16,32], index: 2, kind: output, shape index: {}]
  %s3 = sld [smem:[#allocation0]]
  $region22: #{tpu_custom_call.1} parent=0
    _
  %s5 = ssub.s32 1, %s3
  %s6 = scalar_select 0, %s5, %s3
  $region1: #{tpu_custom_call.1} parent=0
    #allocation2 [shape = 'u8[8192]{0}', space=vmem, size = 0x2000, scoped, tag = 'input window, operand 0, single buffered']
    #allocation3 [shape = 's32[1]{0}', space=sflag, size = 0x4, scoped, tag = 'scoped memory for tpu_custom_call.1']
    #allocation4 [shape = 's32[1]{0}', space=sflag, size = 0x4, scoped, tag = 'scoped memory for tpu_custom_call.1']
    #allocation5 [shape = 'u8[8192]{0}', space=vmem, size = 0x2000, scoped, tag = 'output window, operand 0, single buffered']
    %7 = vsyncpa [#allocation3], 0
    %8 = vsyncpa [#allocation4], 0
    // Predicated region
    $region2: #{tpu_custom_call.1} parent=1 // pred_check
      _
    $region3: #{tpu_custom_call.1} parent=1 // pred_check_branch
      %10 = sbr.rel (0) target = $region5
    $region4: #{tpu_custom_call.1} parent=1 // pred_region
      %s12 = ssub.s32 256, 256
      %13 = vsyncadd [#allocation3], %s12
      %s14 = sshll.u32 [#allocation2], 4
      %s15 = int_to_ptr.vmem [resolvable:$true] %s14
      %20 = dma.hbm_to_vmem [thread:$0]  %s0, 256, %s15, [#allocation3], 128, 128, 8
    $region5: #{tpu_custom_call.1} parent=1 // pred_fallthru
      _
    // Predicated region
    $region6: #{tpu_custom_call.1} parent=1 // pred_check
      _
    $region7: #{tpu_custom_call.1} parent=1 // pred_check_branch
      %22 = sbr.rel (0) target = $region9
    $region8: #{tpu_custom_call.1} parent=1 // pred_region
      _
    $region9: #{tpu_custom_call.1} parent=1 // pred_fallthru
      _
    // Predicated region
    $region10: #{tpu_custom_call.1} parent=1 // pred_check
      _
    $region11: #{tpu_custom_call.1} parent=1 // pred_check_branch
      %24 = sbr.rel (0) target = $region13
    $region12: #{tpu_custom_call.1} parent=1 // pred_region
      %25 = dma.done [#allocation3], 256
    $region13: #{tpu_custom_call.1} parent=1 // pred_fallthru
      _
    %v26 = vld [vmem:[#allocation2] sm:$0xff]
    %v27 = vld [vmem:[#allocation2 + $0x8] sm:$0xff]
    %v28 = vmul.f32 %v26, %v26
    %v29 = vmul.f32 %v27, %v27
    %vm30 = vcmask 261120
    %v31 = vsel %vm30, %v28, 0.0
    %32 = vadd.xlane.f32.xlu0 %v31
    %v33 = vpop.xlane.xlu0 %32
    %v34 = vsel %vm30, %v29, 0.0
    %35 = vadd.xlane.f32.xlu0 %v34
    %v36 = vpop.xlane.xlu0 %35
    %v37 = vmul.f32 %v33, 0.03125
    %v38 = vmul.f32 %v36, 0.03125
    %v39 = vadd.f32 %v37, 1e-06
    %v40 = vadd.f32 %v38, 1e-06
    %v41 = vrsqrt.pop %v39
    %v42 = vrsqrt.pop %v40
    %v43 = vmul.f32 %v26, %v41
    %v44 = vmul.f32 %v27, %v42
    %v45 = vld [vmem:[%s1] sm:$0x1]
    %v47 = vlaneseq
    %v48 = vshrl.u32 %v47, 7
    %v49 = vsub.s32 0, %v48
    %v50 = vrot.slane %v45, %v49
    %v52 = vmul.f32 %v50, %v43
    %v53 = vmul.f32 %v50, %v44
    %54 = vst.msk [vmem:[#allocation5] sm:$0xff] %vm30, %v52
    %55 = vst.msk [vmem:[#allocation5 + $0x8] sm:$0xff] %vm30, %v53
    // Predicated region
    $region14: #{tpu_custom_call.1} parent=1 // pred_check
      _
    $region15: #{tpu_custom_call.1} parent=1 // pred_check_branch
      %57 = sbr.rel (0) target = $region17
    $region16: #{tpu_custom_call.1} parent=1 // pred_region
      %s59 = ssub.s32 256, 256
      %60 = vsyncadd [#allocation4], %s59
      %s61 = sshll.u32 [#allocation5], 4
      %s62 = int_to_ptr.vmem [resolvable:$true] %s61
      %67 = dma.vmem_to_hbm [thread:$0]  %s62, 256, %s2, [#allocation4], 128, 128, 8
    $region17: #{tpu_custom_call.1} parent=1 // pred_fallthru
      _
    // Predicated region
    $region18: #{tpu_custom_call.1} parent=1 // pred_check
      _
    $region19: #{tpu_custom_call.1} parent=1 // pred_check_branch
      %69 = sbr.rel (0) target = $region21
    $region20: #{tpu_custom_call.1} parent=1 // pred_region
      %70 = dma.done [#allocation4], 256
    $region21: #{tpu_custom_call.1} parent=1 // pred_fallthru
      _
    %71 = vsyncpa [#allocation3], 1
    %72 = vsyncpa [#allocation4], 1

</llo_original>
